<compile_context>
chip_gen: v6e
topology: v6e:2x2x1
jax: 0.10.0
libtpu: 0.0.40
codegen_flags: <defaults>
</compile_context>

<pallas_src>
import functools

import jax
import jax.numpy as jnp
from jax.experimental import pallas as pl
from jax.experimental.pallas import tpu as pltpu


# ---------------------------------------------------------------------------
# Kernel
# ---------------------------------------------------------------------------
def _fused_decoder_kernel(x_ref, w1_ref, b1_ref, w2_ref, b2_ref, y_ref, *, seq_len):
    """One row tile (TM = whole sequences) of the fused decoder.

    x_ref : (TM, E)  f32      flattened (B*L, E) rows
    w1_ref: (4, E, H)         layer-1 per-tap weights [t1, t3, t2, t0]
    b1_ref: (1, H)   f32
    w2_ref: (4, H, Np)        layer-2 per-tap weights [he, ho, ho_prev, he_next]
                              columns packed [y4j | y4j+1 | y4j+2 | y4j+3 | 0-pad]
    b2_ref: (1, Np)  f32
    y_ref : (TM, Np) f32      4 consecutive output positions per input row (+ lane pad)
    """
    tm = x_ref.shape[0]
    cdt = w1_ref.dtype                                   # matmul operand dtype (bf16/f32)
    x = x_ref[...]                                       # (TM, E) f32

    # Position of each row inside its sequence (tiles start on sequence boundaries).
    row = jax.lax.broadcasted_iota(jnp.int32, (tm, 1), 0)
    pos = row % seq_len
    first = pos == 0
    last = pos == seq_len - 1

    # Shifted neighbours via XLU roll; wrapped rows land on masked boundary rows.
    zx = jnp.zeros_like(x)
    x_prev = jnp.where(first, zx, pltpu.roll(x, 1, 0))          # x[j-1]
    x_next = jnp.where(last, zx, pltpu.roll(x, tm - 1, 0))      # x[j+1]

    def mm(a, w):
        return jnp.dot(a.astype(cdt), w, preferred_element_type=jnp.float32)

    # ---- layer 1: ConvTranspose1d(E->H, k=4, s=2, p=1) + ReLU --------------
    #   he = h[2j]   = x[j] @ t1 + x[j-1] @ t3 + b1
    #   ho = h[2j+1] = x[j] @ t2 + x[j+1] @ t0 + b1
    he = mm(x, w1_ref[0]) + mm(x_prev, w1_ref[1]) + b1_ref[...]
    ho = mm(x, w1_ref[2]) + mm(x_next, w1_ref[3]) + b1_ref[...]
    he = jnp.maximum(he, 0.0)                            # (TM, H) f32
    ho = jnp.maximum(ho, 0.0)                            # (TM, H) f32

    zh = jnp.zeros_like(ho)
    ho_prev = jnp.where(first, zh, pltpu.roll(ho, 1, 0))        # h[2j-1]
    he_next = jnp.where(last, zh, pltpu.roll(he, tm - 1, 0))    # h[2j+2]

    # ---- layer 2: ConvTranspose1d(H->O, k=4, s=2, p=1) ---------------------
    #   y[4j]   = he @ t1 + ho_prev @ t3
    #   y[4j+1] = he @ t2 + ho      @ t0
    #   y[4j+2] = he @ t3 + ho      @ t1
    #   y[4j+3] = ho @ t2 + he_next @ t0          (+ b2 each)
    y = (mm(he, w2_ref[0]) + mm(ho, w2_ref[1])
         + mm(ho_prev, w2_ref[2]) + mm(he_next, w2_ref[3]) + b2_ref[...])
    y_ref[...] = y.astype(y_ref.dtype)                   # (TM, Np) lane-dense store


# ---------------------------------------------------------------------------
# Wrapper / glue
# ---------------------------------------------------------------------------
def _pack_weights(w1, b1, w2, b2, n_pad, compute_dtype):
    """Per-tap weight stacks for the accumulating matmuls (no K concat, no z)."""
    e, h, _ = w1.shape
    _, o, _ = w2.shape
    w1 = w1.astype(jnp.float32)
    w2 = w2.astype(jnp.float32)

    # layer 1: [t1, t3, t2, t0]  ->  he = x@t1 + x_prev@t3 ; ho = x@t2 + x_next@t0
    w1s = jnp.stack([w1[:, :, 1], w1[:, :, 3], w1[:, :, 2], w1[:, :, 0]], axis=0)  # (4,E,H)

    # layer 2 per-tap column blocks; columns = [y4j | y4j+1 | y4j+2 | y4j+3]
    zho = jnp.zeros((h, o), jnp.float32)
    w2_he = jnp.concatenate([w2[:, :, 1], w2[:, :, 2], w2[:, :, 3], zho], axis=1)
    w2_ho = jnp.concatenate([zho, w2[:, :, 0], w2[:, :, 1], w2[:, :, 2]], axis=1)
    w2_hp = jnp.concatenate([w2[:, :, 3], zho, zho, zho], axis=1)
    w2_hn = jnp.concatenate([zho, zho, zho, w2[:, :, 0]], axis=1)
    w2s = jnp.stack([w2_he, w2_ho, w2_hp, w2_hn], axis=0)                          # (4,H,4O)
    if n_pad > 4 * o:                                       # lane-dense N: pad to 128 multiple
        w2s = jnp.pad(w2s, ((0, 0), (0, 0), (0, n_pad - 4 * o)))

    b1p = b1.astype(jnp.float32).reshape(1, h)
    b2p = jnp.tile(b2.astype(jnp.float32), 4)
    if n_pad > 4 * o:
        b2p = jnp.pad(b2p, (0, n_pad - 4 * o))
    b2p = b2p.reshape(1, n_pad)
    return w1s.astype(compute_dtype), b1p, w2s.astype(compute_dtype), b2p


def _rows_per_tile(batch, seq_len, target=1024):
    """Largest whole-sequence, sublane-aligned row tile <= target; prefer >=2 tiles
    so the 'parallel' grid axis can shard across 2 TensorCores (v7x)."""
    divisors = [d for d in range(1, batch + 1) if batch % d == 0]
    aligned = [d for d in divisors if (d * seq_len) % 8 == 0]
    if not aligned:
        return batch * seq_len                     # full extent is always a legal block
    small = [d for d in aligned if d * seq_len <= target]
    cand = small if small else [min(aligned)]
    multi = [d for d in cand if batch // d >= 2]   # keep >=2 grid tiles when possible
    return (max(multi) if multi else max(cand)) * seq_len


def vqvae_decoder(z_q, params, *, compute_dtype=jnp.bfloat16, rows_target=1024,
                  output_layout="ncl"):
    """z_q: (B, embedding_dim, L) NCL like PyTorch. Returns (B, output_dim, 4L)
    (or (B, 4L, output_dim) if output_layout="nlc" to skip the final transpose)."""
    b, e, l = z_q.shape
    h = params["w1"].shape[1]
    o = params["w2"].shape[1]
    n_out = 4 * o
    n_pad = -(-n_out // 128) * 128                 # lane-dense output columns

    w1s, b1p, w2s, b2p = _pack_weights(
        params["w1"], params["b1"], params["w2"], params["b2"], n_pad, compute_dtype)

    # NCL -> NLC -> flatten (B*L, E); tiles always cover whole sequences.
    # x kept f32 so shifts/masks stay on the f32 VPU path (operands cast at the dot).
    x = jnp.transpose(z_q, (0, 2, 1)).reshape(b * l, e).astype(jnp.float32)

    tm = _rows_per_tile(b, l, rows_target)
    num_tiles = (b * l) // tm
    kernel = functools.partial(_fused_decoder_kernel, seq_len=l)

    elt = jnp.dtype(compute_dtype).itemsize
    flops = 2 * b * l * (4 * e * h + 4 * h * n_pad)
    bytes_accessed = (b * l * e * 4 + b * l * n_pad * 4
                      + (w1s.size + w2s.size) * elt + (h + n_pad) * 4)

    y_packed = pl.pallas_call(
        kernel,
        out_shape=jax.ShapeDtypeStruct((b * l, n_pad), jnp.float32),
        grid_spec=pltpu.PrefetchScalarGridSpec(
            num_scalar_prefetch=0,
            grid=(num_tiles,),
            in_specs=[
                pl.BlockSpec((tm, e), lambda i: (i, 0)),
                pl.BlockSpec((4, e, h), lambda i: (0, 0, 0)),
                pl.BlockSpec((1, h), lambda i: (0, 0)),
                pl.BlockSpec((4, h, n_pad), lambda i: (0, 0, 0)),
                pl.BlockSpec((1, n_pad), lambda i: (0, 0)),
            ],
            out_specs=pl.BlockSpec((tm, n_pad), lambda i: (i, 0)),
        ),
        compiler_params=pltpu.CompilerParams(
            dimension_semantics=("parallel",),
            vmem_limit_bytes=48 * 1024 * 1024,     # fits v7x 64 MiB/TC; headroom on v5e/v6e
        ),
        cost_estimate=pl.CostEstimate(
            flops=flops, transcendentals=0, bytes_accessed=bytes_accessed),
    )(x, w1s, b1p, w2s, b2p)

    # Slice lane padding (fuses with the transpose); (B*L,4O)->(B,4L,O) is contiguous.
    y = y_packed[:, :n_out].reshape(b, 4 * l, o)
    if output_layout == "nlc":
        return y
    return jnp.transpose(y, (0, 2, 1))


# ---------------------------------------------------------------------------
# Pure-JAX reference (direct scatter formulation of ConvTranspose1d)
# ---------------------------------------------------------------------------
def _ref_convT(x, w, bias):  # x: (B, Cin, L), w: (Cin, Cout, 4), bias: (Cout,)
    bsz, _, l = x.shape
    cout = w.shape[1]
    lout = 2 * l
    out = jnp.zeros((bsz, cout, lout), jnp.float32)
    for i in range(l):
        for t in range(4):
            o = 2 * i - 1 + t
            if 0 <= o < lout:
                out = out.at[:, :, o].add(jnp.einsum("bc,cd->bd", x[:, :, i], w[:, :, t]))
    return out + bias[None, :, None]


def _ref_decoder(z_q, params):
    h = jax.nn.relu(_ref_convT(z_q, params["w1"], params["b1"]))
    return _ref_convT(h, params["w2"], params["b2"])


if __name__ == "__main__":
    B, E, H, O, L = 2, 4, 32, 4, 8   # batch, embedding_dim, hidden_dim, output_dim, seq
    k1, k2, k3, k4, k5 = jax.random.split(jax.random.PRNGKey(0), 5)
    params = {
        "w1": 0.1 * jax.random.normal(k1, (E, H, 4), jnp.float32),  # torch ConvT weight (Cin, Cout, K)
        "b1": 0.1 * jax.random.normal(k2, (H,), jnp.float32),
        "w2": 0.1 * jax.random.normal(k3, (H, O, 4), jnp.float32),
        "b2": 0.1 * jax.random.normal(k4, (O,), jnp.float32),
    }
    z_q = jax.random.normal(k5, (B, E, L), jnp.float32)

    ref = _ref_decoder(z_q, params)

    # Strict check: f32 MXU operands (bit-for-bit faithful to the module semantics).
    out_f32 = jax.block_until_ready(
        jax.jit(functools.partial(vqvae_decoder, compute_dtype=jnp.float32))(z_q, params))
    assert out_f32.shape == (B, O, 4 * L), out_f32.shape
    err_f32 = float(jnp.max(jnp.abs(out_f32 - ref)))
    assert jnp.allclose(out_f32, ref, atol=1e-4, rtol=1e-4), err_f32

    # Default path: bf16 MXU operands, f32 accumulation (mixed-precision tolerance).
    out_bf16 = jax.block_until_ready(jax.jit(vqvae_decoder)(z_q, params))
    assert out_bf16.shape == (B, O, 4 * L), out_bf16.shape
    err_bf16 = float(jnp.max(jnp.abs(out_bf16 - ref)))
    assert jnp.allclose(out_bf16, ref, atol=5e-2, rtol=5e-2), err_bf16

    print("KERNEL_OK")
</pallas_src>

<mosaic_0001>
module attributes {stable_mosaic.version = 11 : i64} {
  func.func @_fused_decoder_kernel(%arg0: i32, %arg1: memref<8x4xf32, #tpu.memory_space<vmem>>, %arg2: memref<4x4x32xf32, #tpu.memory_space<vmem>>, %arg3: memref<1x32xf32, #tpu.memory_space<vmem>>, %arg4: memref<4x32x128xf32, #tpu.memory_space<vmem>>, %arg5: memref<1x128xf32, #tpu.memory_space<vmem>>, %arg6: memref<8x128xf32, #tpu.memory_space<vmem>>) attributes {dimension_semantics = [#tpu.dimension_semantics<parallel>], iteration_bounds = array<i64: 2>, scalar_prefetch = 0 : i64, scratch_operands = 0 : i64, tpu.core_type = #tpu.core_type<tc>, window_params = [{transform_indices = @transform_0, window_bounds = array<i64: 8, 4>}, {pipeline_mode = #tpu.pipeline_mode<synchronous>, transform_indices = @transform_1, window_bounds = array<i64: 4, 4, 32>}, {pipeline_mode = #tpu.pipeline_mode<synchronous>, transform_indices = @transform_2, window_bounds = array<i64: 1, 32>}, {pipeline_mode = #tpu.pipeline_mode<synchronous>, transform_indices = @transform_3, window_bounds = array<i64: 4, 32, 128>}, {pipeline_mode = #tpu.pipeline_mode<synchronous>, transform_indices = @transform_4, window_bounds = array<i64: 1, 128>}, {transform_indices = @transform_5, window_bounds = array<i64: 8, 128>}]} {
    %c0 = arith.constant 0 : index
    %c0_0 = arith.constant 0 : index
    %0 = vector.load %arg1[%c0, %c0_0] : memref<8x4xf32, #tpu.memory_space<vmem>>, vector<8x4xf32>
    %1 = tpu.iota {dimensions = array<i32: 0>} : vector<8x1xi32>
    %c8_i32 = arith.constant 8 : i32
    %c0_i32 = arith.constant 0 : i32
    %2 = arith.cmpi eq, %c8_i32, %c0_i32 : i32
    %c1_i32 = arith.constant 1 : i32
    %3 = arith.select %2, %c1_i32, %c8_i32 : i32
    %4 = vector.broadcast %3 : i32 to vector<8x1xi32>
    %5 = arith.remsi %1, %4 : vector<8x1xi32>
    %c0_i32_1 = arith.constant 0 : i32
    %6 = vector.broadcast %c0_i32_1 : i32 to vector<8x1xi32>
    %7 = arith.cmpi ne, %5, %6 : vector<8x1xi32>
    %c0_i32_2 = arith.constant 0 : i32
    %8 = vector.broadcast %c0_i32_2 : i32 to vector<8x1xi32>
    %9 = arith.cmpi slt, %5, %8 : vector<8x1xi32>
    %c0_i32_3 = arith.constant 0 : i32
    %10 = arith.cmpi slt, %3, %c0_i32_3 : i32
    %11 = vector.broadcast %10 : i1 to vector<8x1xi1>
    %12 = vector.broadcast %11 : vector<8x1xi1> to vector<8x1xi1>
    %13 = arith.xori %9, %12 : vector<8x1xi1>
    %14 = arith.andi %13, %7 : vector<8x1xi1>
    %15 = vector.broadcast %3 : i32 to vector<8x1xi32>
    %16 = arith.addi %5, %15 : vector<8x1xi32>
    %17 = arith.select %14, %16, %5 : vector<8x1xi1>, vector<8x1xi32>
    %c0_i32_4 = arith.constant 0 : i32
    %18 = vector.broadcast %c0_i32_4 : i32 to vector<8x1xi32>
    %19 = arith.cmpi eq, %17, %18 : vector<8x1xi32>
    %c7_i32 = arith.constant 7 : i32
    %20 = vector.broadcast %c7_i32 : i32 to vector<8x1xi32>
    %21 = arith.cmpi eq, %17, %20 : vector<8x1xi32>
    %cst = arith.constant 0.000000e+00 : f32
    %22 = vector.broadcast %cst : f32 to vector<8x4xf32>
    %c1_i32_5 = arith.constant 1 : i32
    %23 = tpu.dynamic_rotate %0 by %c1_i32_5 dim 0 : vector<8x4xf32>, i32 -> vector<8x4xf32>
    %24 = vector.shape_cast %19 : vector<8x1xi1> to vector<8x1xi1>
    %25 = vector.broadcast %24 : vector<8x1xi1> to vector<8x4xi1>
    %26 = arith.select %25, %22, %23 : vector<8x4xi1>, vector<8x4xf32>
    %c7_i32_6 = arith.constant 7 : i32
    %27 = tpu.dynamic_rotate %0 by %c7_i32_6 dim 0 : vector<8x4xf32>, i32 -> vector<8x4xf32>
    %28 = vector.shape_cast %21 : vector<8x1xi1> to vector<8x1xi1>
    %29 = vector.broadcast %28 : vector<8x1xi1> to vector<8x4xi1>
    %30 = arith.select %29, %22, %27 : vector<8x4xi1>, vector<8x4xf32>
    %c0_7 = arith.constant 0 : index
    %c0_8 = arith.constant 0 : index
    %c0_9 = arith.constant 0 : index
    %31 = vector.load %arg2[%c0_7, %c0_8, %c0_9] : memref<4x4x32xf32, #tpu.memory_space<vmem>>, vector<1x4x32xf32>
    %32 = vector.shape_cast %31 : vector<1x4x32xf32> to vector<4x32xf32>
    %cst_10 = arith.constant dense<0.000000e+00> : vector<8x32xf32>
    %33 = tpu.matmul %0, %32, %cst_10 {dimension_numbers = #tpu.dot_dimension_numbers<[1], [0], [0], [1], [0, 0, 1, 1], [], []>} : vector<8x4xf32>, vector<4x32xf32>, vector<8x32xf32> -> vector<8x32xf32>
    %c1 = arith.constant 1 : index
    %c0_11 = arith.constant 0 : index
    %c0_12 = arith.constant 0 : index
    %34 = vector.load %arg2[%c1, %c0_11, %c0_12] : memref<4x4x32xf32, #tpu.memory_space<vmem>>, vector<1x4x32xf32>
    %35 = vector.shape_cast %34 : vector<1x4x32xf32> to vector<4x32xf32>
    %cst_13 = arith.constant dense<0.000000e+00> : vector<8x32xf32>
    %36 = tpu.matmul %26, %35, %cst_13 {dimension_numbers = #tpu.dot_dimension_numbers<[1], [0], [0], [1], [0, 0, 1, 1], [], []>} : vector<8x4xf32>, vector<4x32xf32>, vector<8x32xf32> -> vector<8x32xf32>
    %37 = arith.addf %33, %36 : vector<8x32xf32>
    %c0_14 = arith.constant 0 : index
    %c0_15 = arith.constant 0 : index
    %38 = vector.load %arg3[%c0_14, %c0_15] : memref<1x32xf32, #tpu.memory_space<vmem>>, vector<1x32xf32>
    %39 = vector.broadcast %38 : vector<1x32xf32> to vector<8x32xf32>
    %40 = arith.addf %37, %39 : vector<8x32xf32>
    %c2 = arith.constant 2 : index
    %c0_16 = arith.constant 0 : index
    %c0_17 = arith.constant 0 : index
    %41 = vector.load %arg2[%c2, %c0_16, %c0_17] : memref<4x4x32xf32, #tpu.memory_space<vmem>>, vector<1x4x32xf32>
    %42 = vector.shape_cast %41 : vector<1x4x32xf32> to vector<4x32xf32>
    %cst_18 = arith.constant dense<0.000000e+00> : vector<8x32xf32>
    %43 = tpu.matmul %0, %42, %cst_18 {dimension_numbers = #tpu.dot_dimension_numbers<[1], [0], [0], [1], [0, 0, 1, 1], [], []>} : vector<8x4xf32>, vector<4x32xf32>, vector<8x32xf32> -> vector<8x32xf32>
    %c3 = arith.constant 3 : index
    %c0_19 = arith.constant 0 : index
    %c0_20 = arith.constant 0 : index
    %44 = vector.load %arg2[%c3, %c0_19, %c0_20] : memref<4x4x32xf32, #tpu.memory_space<vmem>>, vector<1x4x32xf32>
    %45 = vector.shape_cast %44 : vector<1x4x32xf32> to vector<4x32xf32>
    %cst_21 = arith.constant dense<0.000000e+00> : vector<8x32xf32>
    %46 = tpu.matmul %30, %45, %cst_21 {dimension_numbers = #tpu.dot_dimension_numbers<[1], [0], [0], [1], [0, 0, 1, 1], [], []>} : vector<8x4xf32>, vector<4x32xf32>, vector<8x32xf32> -> vector<8x32xf32>
    %47 = arith.addf %43, %46 : vector<8x32xf32>
    %c0_22 = arith.constant 0 : index
    %c0_23 = arith.constant 0 : index
    %48 = vector.load %arg3[%c0_22, %c0_23] : memref<1x32xf32, #tpu.memory_space<vmem>>, vector<1x32xf32>
    %49 = vector.broadcast %48 : vector<1x32xf32> to vector<8x32xf32>
    %50 = arith.addf %47, %49 : vector<8x32xf32>
    %cst_24 = arith.constant 0.000000e+00 : f32
    %51 = vector.broadcast %cst_24 : f32 to vector<8x32xf32>
    %52 = arith.maximumf %40, %51 : vector<8x32xf32>
    %cst_25 = arith.constant 0.000000e+00 : f32
    %53 = vector.broadcast %cst_25 : f32 to vector<8x32xf32>
    %54 = arith.maximumf %50, %53 : vector<8x32xf32>
    %cst_26 = arith.constant 0.000000e+00 : f32
    %55 = vector.broadcast %cst_26 : f32 to vector<8x32xf32>
    %c1_i32_27 = arith.constant 1 : i32
    %56 = tpu.dynamic_rotate %54 by %c1_i32_27 dim 0 : vector<8x32xf32>, i32 -> vector<8x32xf32>
    %57 = vector.shape_cast %19 : vector<8x1xi1> to vector<8x1xi1>
    %58 = vector.broadcast %57 : vector<8x1xi1> to vector<8x32xi1>
    %59 = arith.select %58, %55, %56 : vector<8x32xi1>, vector<8x32xf32>
    %c7_i32_28 = arith.constant 7 : i32
    %60 = tpu.dynamic_rotate %52 by %c7_i32_28 dim 0 : vector<8x32xf32>, i32 -> vector<8x32xf32>
    %61 = vector.shape_cast %21 : vector<8x1xi1> to vector<8x1xi1>
    %62 = vector.broadcast %61 : vector<8x1xi1> to vector<8x32xi1>
    %63 = arith.select %62, %55, %60 : vector<8x32xi1>, vector<8x32xf32>
    %c0_29 = arith.constant 0 : index
    %c0_30 = arith.constant 0 : index
    %c0_31 = arith.constant 0 : index
    %64 = vector.load %arg4[%c0_29, %c0_30, %c0_31] : memref<4x32x128xf32, #tpu.memory_space<vmem>>, vector<1x32x128xf32>
    %65 = vector.shape_cast %64 : vector<1x32x128xf32> to vector<32x128xf32>
    %cst_32 = arith.constant dense<0.000000e+00> : vector<8x128xf32>
    %66 = tpu.matmul %52, %65, %cst_32 {dimension_numbers = #tpu.dot_dimension_numbers<[1], [0], [0], [1], [0, 0, 1, 1], [], []>} : vector<8x32xf32>, vector<32x128xf32>, vector<8x128xf32> -> vector<8x128xf32>
    %c1_33 = arith.constant 1 : index
    %c0_34 = arith.constant 0 : index
    %c0_35 = arith.constant 0 : index
    %67 = vector.load %arg4[%c1_33, %c0_34, %c0_35] : memref<4x32x128xf32, #tpu.memory_space<vmem>>, vector<1x32x128xf32>
    %68 = vector.shape_cast %67 : vector<1x32x128xf32> to vector<32x128xf32>
    %cst_36 = arith.constant dense<0.000000e+00> : vector<8x128xf32>
    %69 = tpu.matmul %54, %68, %cst_36 {dimension_numbers = #tpu.dot_dimension_numbers<[1], [0], [0], [1], [0, 0, 1, 1], [], []>} : vector<8x32xf32>, vector<32x128xf32>, vector<8x128xf32> -> vector<8x128xf32>
    %70 = arith.addf %66, %69 : vector<8x128xf32>
    %c2_37 = arith.constant 2 : index
    %c0_38 = arith.constant 0 : index
    %c0_39 = arith.constant 0 : index
    %71 = vector.load %arg4[%c2_37, %c0_38, %c0_39] : memref<4x32x128xf32, #tpu.memory_space<vmem>>, vector<1x32x128xf32>
    %72 = vector.shape_cast %71 : vector<1x32x128xf32> to vector<32x128xf32>
    %cst_40 = arith.constant dense<0.000000e+00> : vector<8x128xf32>
    %73 = tpu.matmul %59, %72, %cst_40 {dimension_numbers = #tpu.dot_dimension_numbers<[1], [0], [0], [1], [0, 0, 1, 1], [], []>} : vector<8x32xf32>, vector<32x128xf32>, vector<8x128xf32> -> vector<8x128xf32>
    %74 = arith.addf %70, %73 : vector<8x128xf32>
    %c3_41 = arith.constant 3 : index
    %c0_42 = arith.constant 0 : index
    %c0_43 = arith.constant 0 : index
    %75 = vector.load %arg4[%c3_41, %c0_42, %c0_43] : memref<4x32x128xf32, #tpu.memory_space<vmem>>, vector<1x32x128xf32>
    %76 = vector.shape_cast %75 : vector<1x32x128xf32> to vector<32x128xf32>
    %cst_44 = arith.constant dense<0.000000e+00> : vector<8x128xf32>
    %77 = tpu.matmul %63, %76, %cst_44 {dimension_numbers = #tpu.dot_dimension_numbers<[1], [0], [0], [1], [0, 0, 1, 1], [], []>} : vector<8x32xf32>, vector<32x128xf32>, vector<8x128xf32> -> vector<8x128xf32>
    %78 = arith.addf %74, %77 : vector<8x128xf32>
    %c0_45 = arith.constant 0 : index
    %c0_46 = arith.constant 0 : index
    %79 = vector.load %arg5[%c0_45, %c0_46] : memref<1x128xf32, #tpu.memory_space<vmem>>, vector<1x128xf32>
    %80 = vector.broadcast %79 : vector<1x128xf32> to vector<8x128xf32>
    %81 = arith.addf %78, %80 : vector<8x128xf32>
    %c0_47 = arith.constant 0 : index
    %c0_48 = arith.constant 0 : index
    %82 = vector.load %arg6[%c0_47, %c0_48] : memref<8x128xf32, #tpu.memory_space<vmem>>, vector<8x128xf32>
    tpu.vector_store %arg6[%c0_47, %c0_48], %81 {strides = array<i32>} : memref<8x128xf32, #tpu.memory_space<vmem>>, vector<8x128xf32>,
    return
  }
  func.func @transform_0(%arg0: i32) -> (i32, i32) {
    %c0_i32 = arith.constant 0 : i32
    %c0_i32_0 = arith.constant 0 : i32
    return %arg0, %c0_i32 : i32, i32
  }
  func.func @transform_1(%arg0: i32) -> (i32, i32, i32) {
    %c0_i32 = arith.constant 0 : i32
    %c0_i32_0 = arith.constant 0 : i32
    %c0_i32_1 = arith.constant 0 : i32
    %c0_i32_2 = arith.constant 0 : i32
    return %c0_i32, %c0_i32_0, %c0_i32_1 : i32, i32, i32
  }
  func.func @transform_2(%arg0: i32) -> (i32, i32) {
    %c0_i32 = arith.constant 0 : i32
    %c0_i32_0 = arith.constant 0 : i32
    %c0_i32_1 = arith.constant 0 : i32
    return %c0_i32, %c0_i32_0 : i32, i32
  }
  func.func @transform_3(%arg0: i32) -> (i32, i32, i32) {
    %c0_i32 = arith.constant 0 : i32
    %c0_i32_0 = arith.constant 0 : i32
    %c0_i32_1 = arith.constant 0 : i32
    %c0_i32_2 = arith.constant 0 : i32
    return %c0_i32, %c0_i32_0, %c0_i32_1 : i32, i32, i32
  }
  func.func @transform_4(%arg0: i32) -> (i32, i32) {
    %c0_i32 = arith.constant 0 : i32
    %c0_i32_0 = arith.constant 0 : i32
    %c0_i32_1 = arith.constant 0 : i32
    return %c0_i32, %c0_i32_0 : i32, i32
  }
  func.func @transform_5(%arg0: i32) -> (i32, i32) {
    %c0_i32 = arith.constant 0 : i32
    %c0_i32_0 = arith.constant 0 : i32
    return %arg0, %c0_i32 : i32, i32
  }
}

</mosaic_0001>

<llo_original>
// kernel: tile.8
$region0: #{tile.8}
  #allocation0 [shape = 's32[1]{0}', space=sflag, size = 0x4, scoped, tag = 'scoped memory for tile.8']
  %s0 = inlined_call_operand.vmem [shape: f32[4], index: 0, kind: input, shape index: {}]
  %s1 = inlined_call_operand.vmem [shape: f32[4,4], index: 1, kind: output, shape index: {}]
  // Predicated region
  $region2: #{tile.8} parent=0 // pred_check
    _
  $region3: #{tile.8} parent=0 // pred_check_branch
    %3 = sbr.rel (0) target = $region5
  $region4: #{tile.8} parent=0 // pred_region
    _
  $region5: #{tile.8} parent=0 // pred_fallthru
    _
  %v4 = vld [vmem:[%s0] ss:$0 sm:$0xff]
  %5 = vst [vmem:[%s1] sm:$0xf] %v4

// kernel: tile.9
$region0: #{tile.9}
  %s0 = inlined_call_operand.vmem [shape: f32[4,4], index: 0, kind: input, shape index: {}]
  %s1 = inlined_call_operand.vmem [shape: f32[16], index: 1, kind: output, shape index: {}]
  $region1: #{tile.9} parent=0
    #allocation0 [shape = 'u8[4096]{0}', space=vmem, size = 0x1000, scoped, tag = 'scoped mem for output reshape']
    #allocation1 [shape = 'u8[4096]{0}', space=vmem, size = 0x1000, scoped, tag = 'scoped mem for input reshape']
    %s3 = sshll.u32 1, 4
    %s4 = ssub.s32 %s3, 1
    %v5 = vld [vmem:[%s0] sm:%s4]
    %6 = vst [vmem:[#allocation1] sm:%s4] %v5
    %v7 = vld [vmem:[#allocation1] sm:$0x1]
    %vm8 = vcmask 31744
    %9 = vst.msk [vmem:[#allocation0] sm:$0x1] %vm8, %v7
    %s10 = scalar_lea.vmem [#allocation1], 3
    %v11 = vld [vmem:[%s10] sm:$0x1]
    %12 = vrot.lane.b32.xlu0 %v11, 12
    %v13 = vpop.permute.xlu0 %12
    %vm14 = vcmask 130144
    %15 = vst.msk [vmem:[#allocation0] sm:$0x1] %vm14, %v13
    %s16 = scalar_lea.vmem [#allocation1], 2
    %v17 = vld [vmem:[%s16] sm:$0x1]
    %18 = vrot.lane.b32.xlu0 %v17, 8
    %v19 = vpop.permute.xlu0 %18
    %vm20 = vcmask 97344
    %21 = vst.msk [vmem:[#allocation0] sm:$0x1] %vm20, %v19
    %s22 = scalar_lea.vmem [#allocation1], 1
    %v23 = vld [vmem:[%s22] sm:$0x1]
    %24 = vrot.lane.b32.xlu0 %v23, 4
    %v25 = vpop.permute.xlu0 %24
    %vm26 = vcmask 64544
    %27 = vst.msk [vmem:[#allocation0] sm:$0x1] %vm26, %v25
    %s29 = sshll.u32 1, 1
    %s30 = ssub.s32 %s29, 1
    %v32 = vld [vmem:[#allocation0] sm:%s30]
    %s33 = sshll.u32 1, 1
    %s34 = ssub.s32 %s33, 1
    %35 = vst [vmem:[%s1] sm:%s34] %v32

// kernel: vqvae_decoder.1
$region0: #{vqvae_decoder.1}
  #allocation0 [shape = 'u32[]', space=smem, size = 0x4, offset = 0x4, fixed_abs, tag = 'smem constant byte address 0x4 - core index']
  #allocation1 [shape = 'u32[144,128]{1,0:T(1,128)}', space=vmem, size = 0x12000, scoped, tag = 'internal scratch']
  %s0 = inlined_call_operand.vmem [shape: f32[16,4], index: 0, kind: input, shape index: {}]
  %s1 = inlined_call_operand.vmem [shape: f32[4,4,32], index: 1, kind: input, shape index: {}]
  %s2 = inlined_call_operand.vmem [shape: f32[1,32], index: 2, kind: input, shape index: {}]
  %s3 = inlined_call_operand.vmem [shape: f32[4,32,128], index: 3, kind: input, shape index: {}]
  %s4 = inlined_call_operand.vmem [shape: f32[1,128], index: 4, kind: input, shape index: {}]
  %s5 = inlined_call_operand.vmem [shape: f32[16,128], index: 5, kind: output, shape index: {}]
  %s6 = sld [smem:[#allocation0]]
  $region53: #{vqvae_decoder.1} parent=0
    _
  %s8 = ssub.s32 1, %s6
  %s9 = scalar_select 0, %s8, %s6
  loop: start=0, step=1, limit=4
  $region2: #{vqvae_decoder.1} parent=0 // loop_pre_header
    _
  $region3: #{vqvae_decoder.1} parent=0 // loop_header
    %s11 = sphi 0, %s15
    %p12 = scmp.ge.s32.totalorder %s11, 4
    %s21 = sphi 0, %s23
    %s24 = sphi 0, %s21
    %s25 = sphi 0, %s24
    %s41 = sphi 0, %s25
    %s45 = sphi 0, %s45
    %s47 = sphi 0, %s45
    %s48 = sphi 0, %s47
    %s62 = sphi 0, %s48
    %s66 = sphi 0, %s66
    %s68 = sphi 0, %s66
    %s69 = sphi 0, %s68
    %s83 = sphi 0, %s69
    %s87 = sphi 0, %s87
    %s89 = sphi 0, %s87
    %s90 = sphi 0, %s89
    %s104 = sphi 0, %s90
    %s108 = sphi 0, %s108
    %s110 = sphi 0, %s108
    %s111 = sphi 0, %s110
    %s125 = sphi 0, %s111
    %s131 = sphi 0, %s133
    %s134 = sphi 0, %s131
    %s135 = sphi 0, %s134
    %s151 = sphi 0, %s135
  $region4: #{vqvae_decoder.1} parent=0 // loop_header_branch
    %14 = sbr.rel (%p12) target = $region8
  $region5: #{vqvae_decoder.1} parent=0 // loop_body
    %s16 = ssub.s32 %s11, 1
    %s17 = ssub.s32 %s11, 2
    %s18 = sadd.s32 %s11, 1
    %s19 = ssub.s32 %s11, %s18
    %p20 = scmp.eq.s32.totalorder %s19, 0
    %s22 = sadd.s32 %s21, 1
    %s23 = scalar_select %p20, %s21, %s22
    %p26 = pneg %p20
    %p27 = scmp.eq.s32.totalorder %s11, 1
    %p28 = por %p26, %p27
    %p29 = scmp.ne.s32.totalorder %s21, %s24
    %p30 = scmp.eq.s32.totalorder %s11, 0
    %p31 = por %p29, %p30
    %p32 = scmp.ne.s32.totalorder %s21, %s24
    %p33 = scmp.eq.s32.totalorder %s16, 1
    %p34 = por %p32, %p33
    %p35 = scmp.ne.s32.totalorder %s24, %s25
    %p36 = scmp.eq.s32.totalorder %s16, 0
    %p37 = por %p35, %p36
    %p38 = scmp.ne.s32.totalorder %s24, %s25
    %p39 = scmp.eq.s32.totalorder %s17, 1
    %p40 = por %p38, %p39
    %p42 = scmp.ne.s32.totalorder %s25, %s41
    %p43 = scmp.eq.s32.totalorder %s17, 0
    %p44 = por %p42, %p43
    %s46 = sadd.s32 %s45, 1
    %p49 = scmp.eq.s32.totalorder %s11, 1
    %p50 = scmp.ne.s32.totalorder %s45, %s47
    %p51 = scmp.eq.s32.totalorder %s11, 0
    %p52 = por %p50, %p51
    %p53 = scmp.ne.s32.totalorder %s45, %s47
    %p54 = scmp.eq.s32.totalorder %s16, 1
    %p55 = por %p53, %p54
    %p56 = scmp.ne.s32.totalorder %s47, %s48
    %p57 = scmp.eq.s32.totalorder %s16, 0
    %p58 = por %p56, %p57
    %p59 = scmp.ne.s32.totalorder %s47, %s48
    %p60 = scmp.eq.s32.totalorder %s17, 1
    %p61 = por %p59, %p60
    %p63 = scmp.ne.s32.totalorder %s48, %s62
    %p64 = scmp.eq.s32.totalorder %s17, 0
    %p65 = por %p63, %p64
    %s67 = sadd.s32 %s66, 1
    %p70 = scmp.eq.s32.totalorder %s11, 1
    %p71 = scmp.ne.s32.totalorder %s66, %s68
    %p72 = scmp.eq.s32.totalorder %s11, 0
    %p73 = por %p71, %p72
    %p74 = scmp.ne.s32.totalorder %s66, %s68
    %p75 = scmp.eq.s32.totalorder %s16, 1
    %p76 = por %p74, %p75
    %p77 = scmp.ne.s32.totalorder %s68, %s69
    %p78 = scmp.eq.s32.totalorder %s16, 0
    %p79 = por %p77, %p78
    %p80 = scmp.ne.s32.totalorder %s68, %s69
    %p81 = scmp.eq.s32.totalorder %s17, 1
    %p82 = por %p80, %p81
    %p84 = scmp.ne.s32.totalorder %s69, %s83
    %p85 = scmp.eq.s32.totalorder %s17, 0
    %p86 = por %p84, %p85
    %s88 = sadd.s32 %s87, 1
    %p91 = scmp.eq.s32.totalorder %s11, 1
    %p92 = scmp.ne.s32.totalorder %s87, %s89
    %p93 = scmp.eq.s32.totalorder %s11, 0
    %p94 = por %p92, %p93
    %p95 = scmp.ne.s32.totalorder %s87, %s89
    %p96 = scmp.eq.s32.totalorder %s16, 1
    %p97 = por %p95, %p96
    %p98 = scmp.ne.s32.totalorder %s89, %s90
    %p99 = scmp.eq.s32.totalorder %s16, 0
    %p100 = por %p98, %p99
    %p101 = scmp.ne.s32.totalorder %s89, %s90
    %p102 = scmp.eq.s32.totalorder %s17, 1
    %p103 = por %p101, %p102
    %p105 = scmp.ne.s32.totalorder %s90, %s104
    %p106 = scmp.eq.s32.totalorder %s17, 0
    %p107 = por %p105, %p106
    %s109 = sadd.s32 %s108, 1
    %p112 = scmp.eq.s32.totalorder %s11, 1
    %p113 = scmp.ne.s32.totalorder %s108, %s110
    %p114 = scmp.eq.s32.totalorder %s11, 0
    %p115 = por %p113, %p114
    %p116 = scmp.ne.s32.totalorder %s108, %s110
    %p117 = scmp.eq.s32.totalorder %s16, 1
    %p118 = por %p116, %p117
    %p119 = scmp.ne.s32.totalorder %s110, %s111
    %p120 = scmp.eq.s32.totalorder %s16, 0
    %p121 = por %p119, %p120
    %p122 = scmp.ne.s32.totalorder %s110, %s111
    %p123 = scmp.eq.s32.totalorder %s17, 1
    %p124 = por %p122, %p123
    %p126 = scmp.ne.s32.totalorder %s111, %s125
    %p127 = scmp.eq.s32.totalorder %s17, 0
    %p128 = por %p126, %p127
    %s129 = ssub.s32 %s11, %s18
    %p130 = scmp.eq.s32.totalorder %s129, 0
    %s132 = sadd.s32 %s131, 1
    %s133 = scalar_select %p130, %s131, %s132
    %p136 = pneg %p130
    %p137 = scmp.eq.s32.totalorder %s11, 1
    %p138 = por %p136, %p137
    %p139 = scmp.ne.s32.totalorder %s131, %s134
    %p140 = scmp.eq.s32.totalorder %s11, 0
    %p141 = por %p139, %p140
    %p142 = scmp.ne.s32.totalorder %s131, %s134
    %p143 = scmp.eq.s32.totalorder %s16, 1
    %p144 = por %p142, %p143
    %p145 = scmp.ne.s32.totalorder %s134, %s135
    %p146 = scmp.eq.s32.totalorder %s16, 0
    %p147 = por %p145, %p146
    %p148 = scmp.ne.s32.totalorder %s134, %s135
    %p149 = scmp.eq.s32.totalorder %s17, 1
    %p150 = por %p148, %p149
    %p152 = scmp.ne.s32.totalorder %s135, %s151
    %p153 = scmp.eq.s32.totalorder %s17, 0
    %p154 = por %p152, %p153
    %p155 = scmp.le.s32.totalorder 1, %s11
    %p156 = scmp.lt.s32.totalorder %s11, 3
    %p157 = pnand %p155, %p156
    %p158 = pneg %p157
    // Predicated region
    $region9: #{vqvae_decoder.1} parent=5 // pred_check
      _
    $region10: #{vqvae_decoder.1} parent=5 // pred_check_branch
      %160 = sbr.rel (%p157) target = $region12
    $region11: #{vqvae_decoder.1} parent=5 // pred_region
      %s161 = ssub.s32 %s11, 1
      // Predicated region
      $region13: #{vqvae_decoder.1} parent=11 // pred_check
        %p162 = pneg %p58
      $region14: #{vqvae_decoder.1} parent=11 // pred_check_branch
        %164 = sbr.rel (%p162) target = $region16
      $region15: #{vqvae_decoder.1} parent=11 // pred_region
        _
      $region16: #{vqvae_decoder.1} parent=11 // pred_fallthru
        _
      // Predicated region
      $region17: #{vqvae_decoder.1} parent=11 // pred_check
        %p165 = pneg %p79
      $region18: #{vqvae_decoder.1} parent=11 // pred_check_branch
        %167 = sbr.rel (%p165) target = $region20
      $region19: #{vqvae_decoder.1} parent=11 // pred_region
        _
      $region20: #{vqvae_decoder.1} parent=11 // pred_fallthru
        _
      // Predicated region
      $region21: #{vqvae_decoder.1} parent=11 // pred_check
        %p168 = pneg %p100
      $region22: #{vqvae_decoder.1} parent=11 // pred_check_branch
        %170 = sbr.rel (%p168) target = $region24
      $region23: #{vqvae_decoder.1} parent=11 // pred_region
        _
      $region24: #{vqvae_decoder.1} parent=11 // pred_fallthru
        _
      // Predicated region
      $region25: #{vqvae_decoder.1} parent=11 // pred_check
        %p171 = pneg %p121
      $region26: #{vqvae_decoder.1} parent=11 // pred_check_branch
        %173 = sbr.rel (%p171) target = $region28
      $region27: #{vqvae_decoder.1} parent=11 // pred_region
        _
      $region28: #{vqvae_decoder.1} parent=11 // pred_fallthru
        _
    $region12: #{vqvae_decoder.1} parent=5 // pred_fallthru
      _
    %p174 = scmp.lt.s32.totalorder %s11, 2
    // Predicated region
    $region29: #{vqvae_decoder.1} parent=5 // pred_check
      %p175 = pneg %p174
    $region30: #{vqvae_decoder.1} parent=5 // pred_check_branch
      %177 = sbr.rel (%p175) target = $region32
    $region31: #{vqvae_decoder.1} parent=5 // pred_region
      // Predicated region
      $region33: #{vqvae_decoder.1} parent=31 // pred_check
        %p178 = pneg %p31
      $region34: #{vqvae_decoder.1} parent=31 // pred_check_branch
        %180 = sbr.rel (%p178) target = $region36
      $region35: #{vqvae_decoder.1} parent=31 // pred_region
        %p181 = scmp.lt.s32.totalorder %s11, 1
        %s182 = scalar_select %p181, %s11, 1
        %s183 = smul.addr %s182, 8
        %s184 = scalar_lea.vmem %s0, %s183
      $region36: #{vqvae_decoder.1} parent=31 // pred_fallthru
        _
    $region32: #{vqvae_decoder.1} parent=5 // pred_fallthru
      _
    %p185 = scmp.le.s32.totalorder 1, %s11
    %p186 = scmp.lt.s32.totalorder %s11, 3
    %p187 = pnand %p185, %p186
    %p188 = pneg %p187
    // Predicated region
    $region37: #{vqvae_decoder.1} parent=5 // pred_check
      _
    $region38: #{vqvae_decoder.1} parent=5 // pred_check_branch
      %190 = sbr.rel (%p187) target = $region40
    $region39: #{vqvae_decoder.1} parent=5 // pred_region
      %s191 = ssub.s32 %s11, 1
      %p192 = scmp.lt.s32.totalorder %s16, 1
      %s193 = scalar_select %p192, %s16, 1
      %s194 = smul.addr %s193, 8
      %s195 = scalar_lea.vmem %s0, %s194
      %p196 = pneg %p37
      %p197 = pneg %p34
      %p198 = pneg %p58
      %p199 = pneg %p55
      %p200 = pneg %p79
      %p201 = pneg %p76
      %p202 = pneg %p100
      %p203 = pneg %p97
      %p204 = pneg %p121
      %p205 = pneg %p118
      %p206 = pneg %p147
      %p207 = pneg %p144
      %p208 = scmp.lt.s32.totalorder %s16, 1
      %s209 = scalar_select %p208, %s16, 1
      %s210 = smul.addr %s209, 8
      %s211 = scalar_lea.vmem %s5, %s210
      %p212 = scmp.lt.s32.totalorder %s16, 1
      %s213 = scalar_select %p212, %s16, 1
      %s214 = smul.addr %s213, 8
      %s215 = scalar_lea.vmem %s0, %s214
      %p216 = scmp.lt.s32.totalorder %s16, 1
      %s217 = scalar_select %p216, %s16, 1
      %s218 = smul.addr %s217, 8
      %s219 = scalar_lea.vmem %s5, %s218
      %v220 = vld [vmem:[%s215] sm:$0xff]
      %v221 = vlaneseq
      %v222 = vshrl.u32 %v221, 7
      %vm223 = vcmp.lt.s32.totalorder %v222, 0
      %v224 = vsub.s32 0, %v222
      %v225 = vsel %vm223, %v224, %v222
      %v226 = vshrl.u32 %v225, 3
      %v227 = vand.u32 %v225, 7
      %v228 = vsub.s32 0, %v227
      %v229 = vsel %vm223, %v228, %v227
      %vm230 = vcmp.ne.s32.totalorder %v229, 0
      %vm231 = vcmp.lt.s32.totalorder %v229, 0
      %vm232 = vmand %vm231, %vm230
      %v233 = vadd.s32 %v229, 8
      %v234 = vsel %vm232, %v233, %v229
      %vm235 = vcmp.eq.s32.totalorder %v234, 0
      %vm236 = vcmp.eq.s32.totalorder %v234, 7
      %v237 = vrot.slane %v220, 7
      %v238 = vsel %vm235, 1, 0
      %vm239 = vcmp.eq.s32.totalorder %v238, 1
      %v240 = vsel %vm239, 0.0, %v237
      %v241 = vrot.slane %v220, 1
      %v242 = vsel %vm236, 1, 0
      %vm243 = vcmp.eq.s32.totalorder %v242, 1
      %v244 = vsel %vm243, 0.0, %v241
      %v245 = vld [vmem:[%s1] sm:$0xf]
      %s246 = scalar_lea.vmem %s1, 4
      %v247 = vld [vmem:[%s246] sm:$0xf]
      %vm248 = vcmask 31744
      %v250 = vsel %vm248, %v240, 0
      %vm252 = vcmask 1043456
      %v254 = vsel %vm252, %v247, 0
      %256 = vmatprep.subr.mxu0 0.0
      %257 = vmatpush1.msra.mxu0 0.0
      %258 = vmatprep.subr.mxu0 0.0
      %259 = vmatpush1.msra.mxu0 0.0
      %260 = vmatprep.subr.mxu0 0.0
      %261 = vmatpush1.msra.mxu0 0.0
      %262 = vmatprep.subr.mxu0 0.0
      %263 = vmatpush1.msra.mxu0 0.0
      %264 = vmatprep.subr.mxu0 0.0
      %265 = vmatpush1.msra.mxu0 0.0
      %266 = vmatprep.subr.mxu0 0.0
      %267 = vmatpush1.msra.mxu0 0.0
      %268 = vmatprep.subr.mxu0 0.0
      %269 = vmatpush1.msra.mxu0 0.0
      %270 = vmatprep.subr.mxu0 0.0
      %271 = vmatpush1.msra.mxu0 0.0
      %272 = vmatprep.subr.mxu0 0.0
      %273 = vmatpush1.msra.mxu0 0.0
      %274 = vmatprep.subr.mxu0 0.0
      %275 = vmatpush1.msra.mxu0 0.0
      %276 = vmatprep.subr.mxu0 0.0
      %277 = vmatpush1.msra.mxu0 0.0
      %278 = vmatprep.subr.mxu0 0.0
      %279 = vmatpush1.msra.mxu0 0.0
      %280 = vmatprep.subr.mxu0 0.0
      %281 = vmatpush1.msra.mxu0 0.0
      %282 = vmatprep.subr.mxu0 0.0
      %283 = vmatpush1.msra.mxu0 0.0
      %284 = vmatprep.subr.mxu0 0.0
      %285 = vmatpush1.msra.mxu0 0.0
      %286 = vmatprep.subr.mxu0 0.0
      %287 = vmatpush1.msra.mxu0 %v254
      %288 = vmatprep.subr.mxu0 0.0
      %289 = vmatpush2.msra.mxu0 0.0
      %290 = vmatprep.subr.mxu0 0.0
      %291 = vmatpush2.msra.mxu0 0.0
      %292 = vmatprep.subr.mxu0 0.0
      %293 = vmatpush2.msra.mxu0 0.0
      %294 = vmatprep.subr.mxu0 0.0
      %295 = vmatpush2.msra.mxu0 0.0
      %296 = vmatprep.subr.mxu0 0.0
      %297 = vmatpush2.msra.mxu0 0.0
      %298 = vmatprep.subr.mxu0 0.0
      %299 = vmatpush2.msra.mxu0 0.0
      %300 = vmatprep.subr.mxu0 0.0
      %301 = vmatpush2.msra.mxu0 0.0
      %302 = vmatprep.subr.mxu0 0.0
      %303 = vmatpush2.msra.mxu0 0.0
      %304 = vmatprep.subr.mxu0 0.0
      %305 = vmatpush2.msra.mxu0 0.0
      %306 = vmatprep.subr.mxu0 0.0
      %307 = vmatpush2.msra.mxu0 0.0
      %308 = vmatprep.subr.mxu0 0.0
      %309 = vmatpush2.msra.mxu0 0.0
      %310 = vmatprep.subr.mxu0 0.0
      %311 = vmatpush2.msra.mxu0 0.0
      %312 = vmatprep.subr.mxu0 0.0
      %313 = vmatpush2.msra.mxu0 0.0
      %314 = vmatprep.subr.mxu0 0.0
      %315 = vmatpush2.msra.mxu0 0.0
      %316 = vmatprep.subr.mxu0 0.0
      %317 = vmatpush2.msra.mxu0 0.0
      %318 = vmatprep.subr.mxu0 0.0
      %319 = vmatpush2.msra.mxu0 0.0
      %320 = vmatprep.mubr.f32.mxu0 0.0
      %321 = vmatmul.mubr.f32.gmra.mxu0 %v250
      %v322 = vpop.f32.mrf.mxu0
      %v323 = vadd.f32 0.0, %v322
      %v324 = vpop.f32.mrf.mxu0
      %325 = vdwg.mxu0
      %v327 = vsel %vm248, %v220, 0
      %v330 = vsel %vm252, %v245, 0
      %332 = vmatprep.subr.mxu0 0.0
      %333 = vmatpush1.msra.mxu0 0.0
      %334 = vmatprep.subr.mxu0 0.0
      %335 = vmatpush1.msra.mxu0 0.0
      %336 = vmatprep.subr.mxu0 0.0
      %337 = vmatpush1.msra.mxu0 0.0
      %338 = vmatprep.subr.mxu0 0.0
      %339 = vmatpush1.msra.mxu0 0.0
      %340 = vmatprep.subr.mxu0 0.0
      %341 = vmatpush1.msra.mxu0 0.0
      %342 = vmatprep.subr.mxu0 0.0
      %343 = vmatpush1.msra.mxu0 0.0
      %344 = vmatprep.subr.mxu0 0.0
      %345 = vmatpush1.msra.mxu0 0.0
      %346 = vmatprep.subr.mxu0 0.0
      %347 = vmatpush1.msra.mxu0 0.0
      %348 = vmatprep.subr.mxu0 0.0
      %349 = vmatpush1.msra.mxu0 0.0
      %350 = vmatprep.subr.mxu0 0.0
      %351 = vmatpush1.msra.mxu0 0.0
      %352 = vmatprep.subr.mxu0 0.0
      %353 = vmatpush1.msra.mxu0 0.0
      %354 = vmatprep.subr.mxu0 0.0
      %355 = vmatpush1.msra.mxu0 0.0
      %356 = vmatprep.subr.mxu0 0.0
      %357 = vmatpush1.msra.mxu0 0.0
      %358 = vmatprep.subr.mxu0 0.0
      %359 = vmatpush1.msra.mxu0 0.0
      %360 = vmatprep.subr.mxu0 0.0
      %361 = vmatpush1.msra.mxu0 0.0
      %362 = vmatprep.subr.mxu0 0.0
      %363 = vmatpush1.msra.mxu0 %v330
      %364 = vmatprep.subr.mxu0 0.0
      %365 = vmatpush2.msra.mxu0 0.0
      %366 = vmatprep.subr.mxu0 0.0
      %367 = vmatpush2.msra.mxu0 0.0
      %368 = vmatprep.subr.mxu0 0.0
      %369 = vmatpush2.msra.mxu0 0.0
      %370 = vmatprep.subr.mxu0 0.0
      %371 = vmatpush2.msra.mxu0 0.0
      %372 = vmatprep.subr.mxu0 0.0
      %373 = vmatpush2.msra.mxu0 0.0
      %374 = vmatprep.subr.mxu0 0.0
      %375 = vmatpush2.msra.mxu0 0.0
      %376 = vmatprep.subr.mxu0 0.0
      %377 = vmatpush2.msra.mxu0 0.0
      %378 = vmatprep.subr.mxu0 0.0
      %379 = vmatpush2.msra.mxu0 0.0
      %380 = vmatprep.subr.mxu0 0.0
      %381 = vmatpush2.msra.mxu0 0.0
      %382 = vmatprep.subr.mxu0 0.0
      %383 = vmatpush2.msra.mxu0 0.0
      %384 = vmatprep.subr.mxu0 0.0
      %385 = vmatpush2.msra.mxu0 0.0
      %386 = vmatprep.subr.mxu0 0.0
      %387 = vmatpush2.msra.mxu0 0.0
      %388 = vmatprep.subr.mxu0 0.0
      %389 = vmatpush2.msra.mxu0 0.0
      %390 = vmatprep.subr.mxu0 0.0
      %391 = vmatpush2.msra.mxu0 0.0
      %392 = vmatprep.subr.mxu0 0.0
      %393 = vmatpush2.msra.mxu0 0.0
      %394 = vmatprep.subr.mxu0 0.0
      %395 = vmatpush2.msra.mxu0 0.0
      %396 = vmatprep.mubr.f32.mxu0 0.0
      %397 = vmatmul.mubr.f32.gmra.mxu0 %v327
      %v398 = vpop.f32.mrf.mxu0
      %v399 = vadd.f32 %v323, %v398
      %v400 = vpop.f32.mrf.mxu0
      %401 = vdwg.mxu0
      %v402 = vld [vmem:[%s2] sm:$0x1]
      %v404 = vlaneseq
      %v405 = vshrl.u32 %v404, 7
      %v406 = vsub.s32 0, %v405
      %v407 = vrot.slane %v402, %v406
      %v409 = vadd.f32 %v399, %v407
      %s410 = scalar_lea.vmem %s1, 8
      %v411 = vld [vmem:[%s410] sm:$0xf]
      %s412 = scalar_lea.vmem %s1, 12
      %v413 = vld [vmem:[%s412] sm:$0xf]
      %v415 = vsel %vm248, %v244, 0
      %v418 = vsel %vm252, %v413, 0
      %420 = vmatprep.subr.mxu0 0.0
      %421 = vmatpush1.msra.mxu0 0.0
      %422 = vmatprep.subr.mxu0 0.0
      %423 = vmatpush1.msra.mxu0 0.0
      %424 = vmatprep.subr.mxu0 0.0
      %425 = vmatpush1.msra.mxu0 0.0
      %426 = vmatprep.subr.mxu0 0.0
      %427 = vmatpush1.msra.mxu0 0.0
      %428 = vmatprep.subr.mxu0 0.0
      %429 = vmatpush1.msra.mxu0 0.0
      %430 = vmatprep.subr.mxu0 0.0
      %431 = vmatpush1.msra.mxu0 0.0
      %432 = vmatprep.subr.mxu0 0.0
      %433 = vmatpush1.msra.mxu0 0.0
      %434 = vmatprep.subr.mxu0 0.0
      %435 = vmatpush1.msra.mxu0 0.0
      %436 = vmatprep.subr.mxu0 0.0
      %437 = vmatpush1.msra.mxu0 0.0
      %438 = vmatprep.subr.mxu0 0.0
      %439 = vmatpush1.msra.mxu0 0.0
      %440 = vmatprep.subr.mxu0 0.0
      %441 = vmatpush1.msra.mxu0 0.0
      %442 = vmatprep.subr.mxu0 0.0
      %443 = vmatpush1.msra.mxu0 0.0
      %444 = vmatprep.subr.mxu0 0.0
      %445 = vmatpush1.msra.mxu0 0.0
      %446 = vmatprep.subr.mxu0 0.0
      %447 = vmatpush1.msra.mxu0 0.0
      %448 = vmatprep.subr.mxu0 0.0
      %449 = vmatpush1.msra.mxu0 0.0
      %450 = vmatprep.subr.mxu0 0.0
      %451 = vmatpush1.msra.mxu0 %v418
      %452 = vmatprep.subr.mxu0 0.0
      %453 = vmatpush2.msra.mxu0 0.0
      %454 = vmatprep.subr.mxu0 0.0
      %455 = vmatpush2.msra.mxu0 0.0
      %456 = vmatprep.subr.mxu0 0.0
      %457 = vmatpush2.msra.mxu0 0.0
      %458 = vmatprep.subr.mxu0 0.0
      %459 = vmatpush2.msra.mxu0 0.0
      %460 = vmatprep.subr.mxu0 0.0
      %461 = vmatpush2.msra.mxu0 0.0
      %462 = vmatprep.subr.mxu0 0.0
      %463 = vmatpush2.msra.mxu0 0.0
      %464 = vmatprep.subr.mxu0 0.0
      %465 = vmatpush2.msra.mxu0 0.0
      %466 = vmatprep.subr.mxu0 0.0
      %467 = vmatpush2.msra.mxu0 0.0
      %468 = vmatprep.subr.mxu0 0.0
      %469 = vmatpush2.msra.mxu0 0.0
      %470 = vmatprep.subr.mxu0 0.0
      %471 = vmatpush2.msra.mxu0 0.0
      %472 = vmatprep.subr.mxu0 0.0
      %473 = vmatpush2.msra.mxu0 0.0
      %474 = vmatprep.subr.mxu0 0.0
      %475 = vmatpush2.msra.mxu0 0.0
      %476 = vmatprep.subr.mxu0 0.0
      %477 = vmatpush2.msra.mxu0 0.0
      %478 = vmatprep.subr.mxu0 0.0
      %479 = vmatpush2.msra.mxu0 0.0
      %480 = vmatprep.subr.mxu0 0.0
      %481 = vmatpush2.msra.mxu0 0.0
      %482 = vmatprep.subr.mxu0 0.0
      %483 = vmatpush2.msra.mxu0 0.0
      %484 = vmatprep.mubr.f32.mxu0 0.0
      %485 = vmatmul.mubr.f32.gmra.mxu0 %v415
      %v486 = vpop.f32.mrf.mxu0
      %v487 = vadd.f32 0.0, %v486
      %v488 = vpop.f32.mrf.mxu0
      %489 = vdwg.mxu0
      %v491 = vsel %vm252, %v411, 0
      %493 = vmatprep.subr.mxu0 0.0
      %494 = vmatpush1.msra.mxu0 0.0
      %495 = vmatprep.subr.mxu0 0.0
      %496 = vmatpush1.msra.mxu0 0.0
      %497 = vmatprep.subr.mxu0 0.0
      %498 = vmatpush1.msra.mxu0 0.0
      %499 = vmatprep.subr.mxu0 0.0
      %500 = vmatpush1.msra.mxu0 0.0
      %501 = vmatprep.subr.mxu0 0.0
      %502 = vmatpush1.msra.mxu0 0.0
      %503 = vmatprep.subr.mxu0 0.0
      %504 = vmatpush1.msra.mxu0 0.0
      %505 = vmatprep.subr.mxu0 0.0
      %506 = vmatpush1.msra.mxu0 0.0
      %507 = vmatprep.subr.mxu0 0.0
      %508 = vmatpush1.msra.mxu0 0.0
      %509 = vmatprep.subr.mxu0 0.0
      %510 = vmatpush1.msra.mxu0 0.0
      %511 = vmatprep.subr.mxu0 0.0
      %512 = vmatpush1.msra.mxu0 0.0
      %513 = vmatprep.subr.mxu0 0.0
      %514 = vmatpush1.msra.mxu0 0.0
      %515 = vmatprep.subr.mxu0 0.0
      %516 = vmatpush1.msra.mxu0 0.0
      %517 = vmatprep.subr.mxu0 0.0
      %518 = vmatpush1.msra.mxu0 0.0
      %519 = vmatprep.subr.mxu0 0.0
      %520 = vmatpush1.msra.mxu0 0.0
      %521 = vmatprep.subr.mxu0 0.0
      %522 = vmatpush1.msra.mxu0 0.0
      %523 = vmatprep.subr.mxu0 0.0
      %524 = vmatpush1.msra.mxu0 %v491
      %525 = vmatprep.subr.mxu0 0.0
      %526 = vmatpush2.msra.mxu0 0.0
      %527 = vmatprep.subr.mxu0 0.0
      %528 = vmatpush2.msra.mxu0 0.0
      %529 = vmatprep.subr.mxu0 0.0
      %530 = vmatpush2.msra.mxu0 0.0
      %531 = vmatprep.subr.mxu0 0.0
      %532 = vmatpush2.msra.mxu0 0.0
      %533 = vmatprep.subr.mxu0 0.0
      %534 = vmatpush2.msra.mxu0 0.0
      %535 = vmatprep.subr.mxu0 0.0
      %536 = vmatpush2.msra.mxu0 0.0
      %537 = vmatprep.subr.mxu0 0.0
      %538 = vmatpush2.msra.mxu0 0.0
      %539 = vmatprep.subr.mxu0 0.0
      %540 = vmatpush2.msra.mxu0 0.0
      %541 = vmatprep.subr.mxu0 0.0
      %542 = vmatpush2.msra.mxu0 0.0
      %543 = vmatprep.subr.mxu0 0.0
      %544 = vmatpush2.msra.mxu0 0.0
      %545 = vmatprep.subr.mxu0 0.0
      %546 = vmatpush2.msra.mxu0 0.0
      %547 = vmatprep.subr.mxu0 0.0
      %548 = vmatpush2.msra.mxu0 0.0
      %549 = vmatprep.subr.mxu0 0.0
      %550 = vmatpush2.msra.mxu0 0.0
      %551 = vmatprep.subr.mxu0 0.0
      %552 = vmatpush2.msra.mxu0 0.0
      %553 = vmatprep.subr.mxu0 0.0
      %554 = vmatpush2.msra.mxu0 0.0
      %555 = vmatprep.subr.mxu0 0.0
      %556 = vmatpush2.msra.mxu0 0.0
      %557 = vmatprep.mubr.f32.mxu0 0.0
      %558 = vmatmul.mubr.f32.gmra.mxu0 %v327
      %v559 = vpop.f32.mrf.mxu0
      %v560 = vadd.f32 %v487, %v559
      %v561 = vpop.f32.mrf.mxu0
      %562 = vdwg.mxu0
      %v563 = vadd.f32 %v560, %v407
      %v564 = vmax.f32 %v409, 0.0
      %v565 = vmax.f32 %v563, 0.0
      %v566 = vrot.slane %v565, 7
      %v567 = vsel %vm239, 0.0, %v566
      %v568 = vrot.slane %v564, 1
      %v569 = vsel %vm243, 0.0, %v568
      %v570 = vld [vmem:[%s3] sm:$0xff]
      %v571 = vld [vmem:[%s3 + $0x8] sm:$0xff]
      %v572 = vld [vmem:[%s3 + $0x10] sm:$0xff]
      %v573 = vld [vmem:[%s3 + $0x18] sm:$0xff]
      %s574 = scalar_lea.vmem %s3, 32
      %v575 = vld [vmem:[%s574] sm:$0xff]
      %v576 = vld [vmem:[%s574 + $0x8] sm:$0xff]
      %v577 = vld [vmem:[%s574 + $0x10] sm:$0xff]
      %v578 = vld [vmem:[%s574 + $0x18] sm:$0xff]
      %vm579 = vcmask 261120
      %v581 = vsel %vm579, %v565, 0
      %583 = vmatprep.subr.mxu0 0.0
      %584 = vmatpush1.msra.mxu0 0.0
      %585 = vmatprep.subr.mxu0 0.0
      %586 = vmatpush1.msra.mxu0 0.0
      %587 = vmatprep.subr.mxu0 0.0
      %588 = vmatpush1.msra.mxu0 0.0
      %589 = vmatprep.subr.mxu0 0.0
      %590 = vmatpush1.msra.mxu0 0.0
      %591 = vmatprep.subr.mxu0 0.0
      %592 = vmatpush1.msra.mxu0 0.0
      %593 = vmatprep.subr.mxu0 0.0
      %594 = vmatpush1.msra.mxu0 0.0
      %595 = vmatprep.subr.mxu0 0.0
      %596 = vmatpush1.msra.mxu0 0.0
      %597 = vmatprep.subr.mxu0 0.0
      %598 = vmatpush1.msra.mxu0 0.0
      %599 = vmatprep.subr.mxu0 0.0
      %600 = vmatpush1.msra.mxu0 0.0
      %601 = vmatprep.subr.mxu0 0.0
      %602 = vmatpush1.msra.mxu0 0.0
      %603 = vmatprep.subr.mxu0 0.0
      %604 = vmatpush1.msra.mxu0 0.0
      %605 = vmatprep.subr.mxu0 0.0
      %606 = vmatpush1.msra.mxu0 0.0
      %607 = vmatprep.subr.mxu0 0.0
      %608 = vmatpush1.msra.mxu0 %v578
      %609 = vmatprep.subr.mxu0 0.0
      %610 = vmatpush1.msra.mxu0 %v577
      %611 = vmatprep.subr.mxu0 0.0
      %612 = vmatpush1.msra.mxu0 %v576
      %613 = vmatprep.subr.mxu0 0.0
      %614 = vmatpush1.msra.mxu0 %v575
      %615 = vmatprep.subr.mxu0 0.0
      %616 = vmatpush2.msra.mxu0 0.0
      %617 = vmatprep.subr.mxu0 0.0
      %618 = vmatpush2.msra.mxu0 0.0
      %619 = vmatprep.subr.mxu0 0.0
      %620 = vmatpush2.msra.mxu0 0.0
      %621 = vmatprep.subr.mxu0 0.0
      %622 = vmatpush2.msra.mxu0 0.0
      %623 = vmatprep.subr.mxu0 0.0
      %624 = vmatpush2.msra.mxu0 0.0
      %625 = vmatprep.subr.mxu0 0.0
      %626 = vmatpush2.msra.mxu0 0.0
      %627 = vmatprep.subr.mxu0 0.0
      %628 = vmatpush2.msra.mxu0 0.0
      %629 = vmatprep.subr.mxu0 0.0
      %630 = vmatpush2.msra.mxu0 0.0
      %631 = vmatprep.subr.mxu0 0.0
      %632 = vmatpush2.msra.mxu0 0.0
      %633 = vmatprep.subr.mxu0 0.0
      %634 = vmatpush2.msra.mxu0 0.0
      %635 = vmatprep.subr.mxu0 0.0
      %636 = vmatpush2.msra.mxu0 0.0
      %637 = vmatprep.subr.mxu0 0.0
      %638 = vmatpush2.msra.mxu0 0.0
      %639 = vmatprep.subr.mxu0 0.0
      %640 = vmatpush2.msra.mxu0 0.0
      %641 = vmatprep.subr.mxu0 0.0
      %642 = vmatpush2.msra.mxu0 0.0
      %643 = vmatprep.subr.mxu0 0.0
      %644 = vmatpush2.msra.mxu0 0.0
      %645 = vmatprep.subr.mxu0 0.0
      %646 = vmatpush2.msra.mxu0 0.0
      %647 = vmatprep.mubr.f32.mxu0 0.0
      %648 = vmatmul.mubr.f32.gmra.mxu0 %v581
      %v649 = vpop.f32.mrf.mxu0
      %v650 = vadd.f32 0.0, %v649
      %v651 = vpop.f32.mrf.mxu0
      %652 = vdwg.mxu0
      %v654 = vsel %vm579, %v564, 0
      %656 = vmatprep.subr.mxu0 0.0
      %657 = vmatpush1.msra.mxu0 0.0
      %658 = vmatprep.subr.mxu0 0.0
      %659 = vmatpush1.msra.mxu0 0.0
      %660 = vmatprep.subr.mxu0 0.0
      %661 = vmatpush1.msra.mxu0 0.0
      %662 = vmatprep.subr.mxu0 0.0
      %663 = vmatpush1.msra.mxu0 0.0
      %664 = vmatprep.subr.mxu0 0.0
      %665 = vmatpush1.msra.mxu0 0.0
      %666 = vmatprep.subr.mxu0 0.0
      %667 = vmatpush1.msra.mxu0 0.0
      %668 = vmatprep.subr.mxu0 0.0
      %669 = vmatpush1.msra.mxu0 0.0
      %670 = vmatprep.subr.mxu0 0.0
      %671 = vmatpush1.msra.mxu0 0.0
      %672 = vmatprep.subr.mxu0 0.0
      %673 = vmatpush1.msra.mxu0 0.0
      %674 = vmatprep.subr.mxu0 0.0
      %675 = vmatpush1.msra.mxu0 0.0
      %676 = vmatprep.subr.mxu0 0.0
      %677 = vmatpush1.msra.mxu0 0.0
      %678 = vmatprep.subr.mxu0 0.0
      %679 = vmatpush1.msra.mxu0 0.0
      %680 = vmatprep.subr.mxu0 0.0
      %681 = vmatpush1.msra.mxu0 %v573
      %682 = vmatprep.subr.mxu0 0.0
      %683 = vmatpush1.msra.mxu0 %v572
      %684 = vmatprep.subr.mxu0 0.0
      %685 = vmatpush1.msra.mxu0 %v571
      %686 = vmatprep.subr.mxu0 0.0
      %687 = vmatpush1.msra.mxu0 %v570
      %688 = vmatprep.subr.mxu0 0.0
      %689 = vmatpush2.msra.mxu0 0.0
      %690 = vmatprep.subr.mxu0 0.0
      %691 = vmatpush2.msra.mxu0 0.0
      %692 = vmatprep.subr.mxu0 0.0
      %693 = vmatpush2.msra.mxu0 0.0
      %694 = vmatprep.subr.mxu0 0.0
      %695 = vmatpush2.msra.mxu0 0.0
      %696 = vmatprep.subr.mxu0 0.0
      %697 = vmatpush2.msra.mxu0 0.0
      %698 = vmatprep.subr.mxu0 0.0
      %699 = vmatpush2.msra.mxu0 0.0
      %700 = vmatprep.subr.mxu0 0.0
      %701 = vmatpush2.msra.mxu0 0.0
      %702 = vmatprep.subr.mxu0 0.0
      %703 = vmatpush2.msra.mxu0 0.0
      %704 = vmatprep.subr.mxu0 0.0
      %705 = vmatpush2.msra.mxu0 0.0
      %706 = vmatprep.subr.mxu0 0.0
      %707 = vmatpush2.msra.mxu0 0.0
      %708 = vmatprep.subr.mxu0 0.0
      %709 = vmatpush2.msra.mxu0 0.0
      %710 = vmatprep.subr.mxu0 0.0
      %711 = vmatpush2.msra.mxu0 0.0
      %712 = vmatprep.subr.mxu0 0.0
      %713 = vmatpush2.msra.mxu0 0.0
      %714 = vmatprep.subr.mxu0 0.0
      %715 = vmatpush2.msra.mxu0 0.0
      %716 = vmatprep.subr.mxu0 0.0
      %717 = vmatpush2.msra.mxu0 0.0
      %718 = vmatprep.subr.mxu0 0.0
      %719 = vmatpush2.msra.mxu0 0.0
      %720 = vmatprep.mubr.f32.mxu0 0.0
      %721 = vmatmul.mubr.f32.gmra.mxu0 %v654
      %v722 = vpop.f32.mrf.mxu0
      %v723 = vadd.f32 %v650, %v722
      %v724 = vpop.f32.mrf.mxu0
      %725 = vdwg.mxu0
      %s726 = scalar_lea.vmem %s3, 64
      %v727 = vld [vmem:[%s726] sm:$0xff]
      %v728 = vld [vmem:[%s726 + $0x8] sm:$0xff]
      %v729 = vld [vmem:[%s726 + $0x10] sm:$0xff]
      %v730 = vld [vmem:[%s726 + $0x18] sm:$0xff]
      %v732 = vsel %vm579, %v567, 0
      %734 = vmatprep.subr.mxu0 0.0
      %735 = vmatpush1.msra.mxu0 0.0
      %736 = vmatprep.subr.mxu0 0.0
      %737 = vmatpush1.msra.mxu0 0.0
      %738 = vmatprep.subr.mxu0 0.0
      %739 = vmatpush1.msra.mxu0 0.0
      %740 = vmatprep.subr.mxu0 0.0
      %741 = vmatpush1.msra.mxu0 0.0
      %742 = vmatprep.subr.mxu0 0.0
      %743 = vmatpush1.msra.mxu0 0.0
      %744 = vmatprep.subr.mxu0 0.0
      %745 = vmatpush1.msra.mxu0 0.0
      %746 = vmatprep.subr.mxu0 0.0
      %747 = vmatpush1.msra.mxu0 0.0
      %748 = vmatprep.subr.mxu0 0.0
      %749 = vmatpush1.msra.mxu0 0.0
      %750 = vmatprep.subr.mxu0 0.0
      %751 = vmatpush1.msra.mxu0 0.0
      %752 = vmatprep.subr.mxu0 0.0
      %753 = vmatpush1.msra.mxu0 0.0
      %754 = vmatprep.subr.mxu0 0.0
      %755 = vmatpush1.msra.mxu0 0.0
      %756 = vmatprep.subr.mxu0 0.0
      %757 = vmatpush1.msra.mxu0 0.0
      %758 = vmatprep.subr.mxu0 0.0
      %759 = vmatpush1.msra.mxu0 %v730
      %760 = vmatprep.subr.mxu0 0.0
      %761 = vmatpush1.msra.mxu0 %v729
      %762 = vmatprep.subr.mxu0 0.0
      %763 = vmatpush1.msra.mxu0 %v728
      %764 = vmatprep.subr.mxu0 0.0
      %765 = vmatpush1.msra.mxu0 %v727
      %766 = vmatprep.subr.mxu0 0.0
      %767 = vmatpush2.msra.mxu0 0.0
      %768 = vmatprep.subr.mxu0 0.0
      %769 = vmatpush2.msra.mxu0 0.0
      %770 = vmatprep.subr.mxu0 0.0
      %771 = vmatpush2.msra.mxu0 0.0
      %772 = vmatprep.subr.mxu0 0.0
      %773 = vmatpush2.msra.mxu0 0.0
      %774 = vmatprep.subr.mxu0 0.0
      %775 = vmatpush2.msra.mxu0 0.0
      %776 = vmatprep.subr.mxu0 0.0
      %777 = vmatpush2.msra.mxu0 0.0
      %778 = vmatprep.subr.mxu0 0.0
      %779 = vmatpush2.msra.mxu0 0.0
      %780 = vmatprep.subr.mxu0 0.0
      %781 = vmatpush2.msra.mxu0 0.0
      %782 = vmatprep.subr.mxu0 0.0
      %783 = vmatpush2.msra.mxu0 0.0
      %784 = vmatprep.subr.mxu0 0.0
      %785 = vmatpush2.msra.mxu0 0.0
      %786 = vmatprep.subr.mxu0 0.0
      %787 = vmatpush2.msra.mxu0 0.0
      %788 = vmatprep.subr.mxu0 0.0
      %789 = vmatpush2.msra.mxu0 0.0
      %790 = vmatprep.subr.mxu0 0.0
      %791 = vmatpush2.msra.mxu0 0.0
      %792 = vmatprep.subr.mxu0 0.0
      %793 = vmatpush2.msra.mxu0 0.0
      %794 = vmatprep.subr.mxu0 0.0
      %795 = vmatpush2.msra.mxu0 0.0
      %796 = vmatprep.subr.mxu0 0.0
      %797 = vmatpush2.msra.mxu0 0.0
      %798 = vmatprep.mubr.f32.mxu0 0.0
      %799 = vmatmul.mubr.f32.gmra.mxu0 %v732
      %v800 = vpop.f32.mrf.mxu0
      %v801 = vadd.f32 0.0, %v800
      %v802 = vpop.f32.mrf.mxu0
      %803 = vdwg.mxu0
      %v804 = vadd.f32 %v723, %v801
      %s805 = scalar_lea.vmem %s3, 96
      %v806 = vld [vmem:[%s805] sm:$0xff]
      %v807 = vld [vmem:[%s805 + $0x8] sm:$0xff]
      %v808 = vld [vmem:[%s805 + $0x10] sm:$0xff]
      %v809 = vld [vmem:[%s805 + $0x18] sm:$0xff]
      %v811 = vsel %vm579, %v569, 0
      %813 = vmatprep.subr.mxu0 0.0
      %814 = vmatpush1.msra.mxu0 0.0
      %815 = vmatprep.subr.mxu0 0.0
      %816 = vmatpush1.msra.mxu0 0.0
      %817 = vmatprep.subr.mxu0 0.0
      %818 = vmatpush1.msra.mxu0 0.0
      %819 = vmatprep.subr.mxu0 0.0
      %820 = vmatpush1.msra.mxu0 0.0
      %821 = vmatprep.subr.mxu0 0.0
      %822 = vmatpush1.msra.mxu0 0.0
      %823 = vmatprep.subr.mxu0 0.0
      %824 = vmatpush1.msra.mxu0 0.0
      %825 = vmatprep.subr.mxu0 0.0
      %826 = vmatpush1.msra.mxu0 0.0
      %827 = vmatprep.subr.mxu0 0.0
      %828 = vmatpush1.msra.mxu0 0.0
      %829 = vmatprep.subr.mxu0 0.0
      %830 = vmatpush1.msra.mxu0 0.0
      %831 = vmatprep.subr.mxu0 0.0
      %832 = vmatpush1.msra.mxu0 0.0
      %833 = vmatprep.subr.mxu0 0.0
      %834 = vmatpush1.msra.mxu0 0.0
      %835 = vmatprep.subr.mxu0 0.0
      %836 = vmatpush1.msra.mxu0 0.0
      %837 = vmatprep.subr.mxu0 0.0
      %838 = vmatpush1.msra.mxu0 %v809
      %839 = vmatprep.subr.mxu0 0.0
      %840 = vmatpush1.msra.mxu0 %v808
      %841 = vmatprep.subr.mxu0 0.0
      %842 = vmatpush1.msra.mxu0 %v807
      %843 = vmatprep.subr.mxu0 0.0
      %844 = vmatpush1.msra.mxu0 %v806
      %845 = vmatprep.subr.mxu0 0.0
      %846 = vmatpush2.msra.mxu0 0.0
      %847 = vmatprep.subr.mxu0 0.0
      %848 = vmatpush2.msra.mxu0 0.0
      %849 = vmatprep.subr.mxu0 0.0
      %850 = vmatpush2.msra.mxu0 0.0
      %851 = vmatprep.subr.mxu0 0.0
      %852 = vmatpush2.msra.mxu0 0.0
      %853 = vmatprep.subr.mxu0 0.0
      %854 = vmatpush2.msra.mxu0 0.0
      %855 = vmatprep.subr.mxu0 0.0
      %856 = vmatpush2.msra.mxu0 0.0
      %857 = vmatprep.subr.mxu0 0.0
      %858 = vmatpush2.msra.mxu0 0.0
      %859 = vmatprep.subr.mxu0 0.0
      %860 = vmatpush2.msra.mxu0 0.0
      %861 = vmatprep.subr.mxu0 0.0
      %862 = vmatpush2.msra.mxu0 0.0
      %863 = vmatprep.subr.mxu0 0.0
      %864 = vmatpush2.msra.mxu0 0.0
      %865 = vmatprep.subr.mxu0 0.0
      %866 = vmatpush2.msra.mxu0 0.0
      %867 = vmatprep.subr.mxu0 0.0
      %868 = vmatpush2.msra.mxu0 0.0
      %869 = vmatprep.subr.mxu0 0.0
      %870 = vmatpush2.msra.mxu0 0.0
      %871 = vmatprep.subr.mxu0 0.0
      %872 = vmatpush2.msra.mxu0 0.0
      %873 = vmatprep.subr.mxu0 0.0
      %874 = vmatpush2.msra.mxu0 0.0
      %875 = vmatprep.subr.mxu0 0.0
      %876 = vmatpush2.msra.mxu0 0.0
      %877 = vmatprep.mubr.f32.mxu0 0.0
      %878 = vmatmul.mubr.f32.gmra.mxu0 %v811
      %v879 = vpop.f32.mrf.mxu0
      %v880 = vadd.f32 0.0, %v879
      %v881 = vpop.f32.mrf.mxu0
      %882 = vdwg.mxu0
      %v883 = vadd.f32 %v804, %v880
      %v884 = vld [vmem:[%s4] sm:$0x1]
      %v886 = vlaneseq
      %v887 = vshrl.u32 %v886, 7
      %v888 = vsub.s32 0, %v887
      %v889 = vrot.slane %v884, %v888
      %v891 = vadd.f32 %v883, %v889
      %892 = vst [vmem:[%s219] sm:$0xff] %v891
      %p893 = scmp.lt.s32.totalorder %s16, 1
      %s894 = scalar_select %p893, %s16, 1
      %s895 = smul.addr %s894, 8
      %s896 = scalar_lea.vmem %s5, %s895
      // Predicated region
      $region41: #{vqvae_decoder.1} parent=39 // pred_check
        %p897 = pneg %p144
      $region42: #{vqvae_decoder.1} parent=39 // pred_check_branch
        %899 = sbr.rel (%p897) target = $region44
      $region43: #{vqvae_decoder.1} parent=39 // pred_region
        _
      $region44: #{vqvae_decoder.1} parent=39 // pred_fallthru
        _
    $region40: #{vqvae_decoder.1} parent=5 // pred_fallthru
      _
    %p900 = scmp.le.s32.totalorder 2, %s11
    // Predicated region
    $region45: #{vqvae_decoder.1} parent=5 // pred_check
      %p901 = pneg %p900
    $region46: #{vqvae_decoder.1} parent=5 // pred_check_branch
      %903 = sbr.rel (%p901) target = $region48
    $region47: #{vqvae_decoder.1} parent=5 // pred_region
      %s904 = ssub.s32 %s11, 2
      // Predicated region
      $region49: #{vqvae_decoder.1} parent=47 // pred_check
        %p905 = pneg %p150
      $region50: #{vqvae_decoder.1} parent=47 // pred_check_branch
        %907 = sbr.rel (%p905) target = $region52
      $region51: #{vqvae_decoder.1} parent=47 // pred_region
        %p908 = scmp.lt.s32.totalorder %s17, 1
        %s909 = scalar_select %p908, %s17, 1
        %s910 = smul.addr %s909, 8
        %s911 = scalar_lea.vmem %s5, %s910
      $region52: #{vqvae_decoder.1} parent=47 // pred_fallthru
        _
    $region48: #{vqvae_decoder.1} parent=5 // pred_fallthru
      _
  $region6: #{vqvae_decoder.1} parent=0 // loop_footer
    %s15 = sadd.s32 1, %s11
  $region7: #{vqvae_decoder.1} parent=0 // loop_footer_branch
    %10 = sbr.rel target = $region3
  $region8: #{vqvae_decoder.1} parent=0 // loop_exit
    _

</llo_original>
